<compile_context>
chip_gen: v5e
topology: v5e:2x2
jax: 0.10.0
libtpu: 0.0.40
codegen_flags: <defaults>
</compile_context>

<pallas_src>
import numpy as np
import jax
import jax.numpy as jnp
from jax.experimental import pallas as pl
from jax.experimental.pallas import tpu as pltpu


def _round_up(x: int, m: int) -> int:
    return ((x + m - 1) // m) * m


def _spec(shape, index_map, mode=None):
    if mode is None:
        return pl.BlockSpec(shape, index_map)
    return pl.BlockSpec(shape, index_map, pipeline_mode=mode)


def _timestep_embed_kernel(x_ref, w1_ref, b1_ref, w2_ref, b2_ref, o_ref):
    # linear_1 + bias (inputs in weight dtype, f32 accumulation on the MXU)
    x = x_ref[...].astype(w1_ref.dtype)
    h = jnp.dot(x, w1_ref[...], preferred_element_type=jnp.float32)
    h = h + b1_ref[...].astype(jnp.float32)            # (TM, D), broadcasts over rows
    # SiLU in f32: x * sigmoid(x)  (sigmoid -> EUP slot, essentially free)
    h = h * jax.nn.sigmoid(h)
    # linear_2 + bias; intermediate downcast to weight dtype for the MXU fast path
    y = jnp.dot(h.astype(w2_ref.dtype), w2_ref[...],
                preferred_element_type=jnp.float32)
    o_ref[...] = (y + b2_ref[...].astype(jnp.float32)).astype(o_ref.dtype)


def prepare_timestep_embedding_params(w1, b1, w2, b2, param_dtype=jnp.bfloat16):
    """One-time parameter prep (OUTSIDE the hot path).

    w1: (time_embed_dim, in_channels)      -- torch nn.Linear layout (out, in)
    b1: (time_embed_dim,)
    w2: (time_embed_dim_out, time_embed_dim)
    b2: (time_embed_dim_out,)

    Returns (in, out)-oriented, optionally bf16-cast params for the kernel.
    """
    if param_dtype is None:
        param_dtype = w1.dtype
    d = w1.shape[0]
    dout = w2.shape[0]
    return {
        "w1t": jnp.asarray(jnp.transpose(w1), dtype=param_dtype),   # (cin, d)
        "b1r": jnp.asarray(b1.reshape(1, d), dtype=param_dtype),    # (1, d)
        "w2t": jnp.asarray(jnp.transpose(w2), dtype=param_dtype),   # (d, dout)
        "b2r": jnp.asarray(b2.reshape(1, dout), dtype=param_dtype), # (1, dout)
    }


def timestep_embedding_forward(sample, params, *, block_rows=512, block_cols=1024):
    """Fused TimestepEmbedding forward.  sample: (..., in_channels)."""
    w1t, b1r, w2t, b2r = params["w1t"], params["b1r"], params["w2t"], params["b2r"]

    orig_lead = sample.shape[:-1]
    cin = sample.shape[-1]
    d = w1t.shape[1]
    dout = w2t.shape[1]

    x = sample.reshape(-1, cin)
    m = x.shape[0]

    # Row tile: whole array when small (block == full dim is always legal),
    # otherwise balanced multiple-of-8 tiles; ragged last block handled by
    # the pipeline (no jnp.pad, no extra HBM copy).
    if m <= block_rows:
        tm = m
    else:
        n_row_tiles = pl.cdiv(m, block_rows)
        tm = _round_up(pl.cdiv(m, n_row_tiles), 8)
    grid_m = pl.cdiv(m, tm)

    # N tile over dout: full when small; multiple-of-128 tiles when large so
    # per-core W2 VMEM stays bounded (v7x: 64 MiB/TC) and megacore can split N.
    if dout > block_cols and dout % 128 == 0:
        tn = block_cols
    else:
        tn = dout
    grid_n = pl.cdiv(dout, tn)

    # Constant-index blocks: single-buffered.  W2/b2 only when their block
    # index is actually constant (grid_n == 1); otherwise keep default
    # double-buffering so the next W2 tile's DMA can overlap compute.
    resident = pl.Buffered(1)
    w2_mode = resident if grid_n == 1 else None

    wbytes = jnp.dtype(w1t.dtype).itemsize
    xbytes = jnp.dtype(x.dtype).itemsize
    obytes = jnp.dtype(sample.dtype).itemsize
    w2_bufs = 1 if grid_n == 1 else 2
    vmem_bytes = (
        cin * d * wbytes + d * wbytes                    # W1, b1 (single-buffered)
        + w2_bufs * (d * tn * wbytes + tn * wbytes)      # W2 tile, b2 tile
        + 2 * tm * cin * xbytes                          # x tile (double-buffered)
        + 2 * tm * tn * obytes                           # out tile (double-buffered)
        + tm * d * 4                                     # f32 intermediate headroom
    )
    vmem_limit = min(int(2 * vmem_bytes + (4 << 20)), 96 << 20)

    cost = pl.CostEstimate(
        flops=2 * m * cin * d * grid_n + 2 * m * d * dout,
        transcendentals=m * d * grid_n,
        bytes_accessed=(m * cin * xbytes + cin * d * wbytes + d * wbytes
                        + d * dout * wbytes + dout * wbytes + m * dout * obytes),
    )

    out = pl.pallas_call(
        _timestep_embed_kernel,
        out_shape=jax.ShapeDtypeStruct((m, dout), sample.dtype),
        grid=(grid_m, grid_n),
        in_specs=[
            _spec((tm, cin), lambda i, j: (i, 0)),               # x tile (pipelined)
            _spec((cin, d), lambda i, j: (0, 0), resident),      # W1 (resident, 1-buf)
            _spec((1, d), lambda i, j: (0, 0), resident),        # b1 (resident, 1-buf)
            _spec((d, tn), lambda i, j: (0, j), w2_mode),        # W2 tile
            _spec((1, tn), lambda i, j: (0, j), w2_mode),        # b2 tile
        ],
        out_specs=pl.BlockSpec((tm, tn), lambda i, j: (i, j)),
        compiler_params=pltpu.CompilerParams(
            dimension_semantics=("parallel", "parallel"),
            vmem_limit_bytes=vmem_limit,
        ),
        cost_estimate=cost,
    )(x, w1t, b1r, w2t, b2r)

    return out.reshape(orig_lead + (dout,))


if __name__ == "__main__":
    # Small shapes consistent with the module: batch=2, in_channels=32,
    # time_embed_dim=128 (out_dim defaults to time_embed_dim).
    B, in_channels, time_embed_dim = 2, 32, 128

    key = jax.random.PRNGKey(0)
    k_x, k_w1, k_b1, k_w2, k_b2 = jax.random.split(key, 5)

    sample = jax.random.normal(k_x, (B, in_channels), dtype=jnp.float32)
    w1 = jax.random.normal(k_w1, (time_embed_dim, in_channels), dtype=jnp.float32) * 0.1
    b1 = jax.random.normal(k_b1, (time_embed_dim,), dtype=jnp.float32) * 0.1
    w2 = jax.random.normal(k_w2, (time_embed_dim, time_embed_dim), dtype=jnp.float32) * 0.1
    b2 = jax.random.normal(k_b2, (time_embed_dim,), dtype=jnp.float32) * 0.1

    # One-time parameter prep (pre-transposed, bf16) outside the hot path.
    params = prepare_timestep_embedding_params(w1, b1, w2, b2,
                                               param_dtype=jnp.bfloat16)

    fwd = jax.jit(timestep_embedding_forward)
    y = jax.block_until_ready(fwd(sample, params))

    # Pure-JAX reference of the module's forward, using the same bf16 params
    # (math in f32).  The kernel additionally downcasts the intermediate to
    # bf16 before the second matmul -> loose tolerance.
    w1f = params["w1t"].astype(jnp.float32)
    b1f = params["b1r"].astype(jnp.float32)
    w2f = params["w2t"].astype(jnp.float32)
    b2f = params["b2r"].astype(jnp.float32)
    h_ref = sample @ w1f + b1f
    h_ref = h_ref * jax.nn.sigmoid(h_ref)          # SiLU
    y_ref = h_ref @ w2f + b2f

    assert y.shape == (B, time_embed_dim), y.shape
    np.testing.assert_allclose(np.asarray(y, dtype=np.float32),
                               np.asarray(y_ref), rtol=2e-2, atol=2e-2)
    print("KERNEL_OK")
</pallas_src>

<mosaic_0001>
module attributes {stable_mosaic.version = 11 : i64} {
  func.func @_timestep_embed_kernel(%arg0: i32, %arg1: i32, %arg2: memref<2x32xf32, #tpu.memory_space<vmem>>, %arg3: memref<32x128xbf16, #tpu.memory_space<vmem>>, %arg4: memref<1x128xbf16, #tpu.memory_space<vmem>>, %arg5: memref<128x128xbf16, #tpu.memory_space<vmem>>, %arg6: memref<1x128xbf16, #tpu.memory_space<vmem>>, %arg7: memref<2x128xf32, #tpu.memory_space<vmem>>) attributes {dimension_semantics = [#tpu.dimension_semantics<parallel>, #tpu.dimension_semantics<parallel>], iteration_bounds = array<i64: 1, 1>, scalar_prefetch = 0 : i64, scratch_operands = 0 : i64, tpu.core_type = #tpu.core_type<tc>, window_params = [{transform_indices = @transform_0, window_bounds = array<i64: 2, 32>}, {pipeline_mode = #tpu.pipeline_mode<synchronous>, transform_indices = @transform_1, window_bounds = array<i64: 32, 128>}, {pipeline_mode = #tpu.pipeline_mode<synchronous>, transform_indices = @transform_2, window_bounds = array<i64: 1, 128>}, {pipeline_mode = #tpu.pipeline_mode<synchronous>, transform_indices = @transform_3, window_bounds = array<i64: 128, 128>}, {pipeline_mode = #tpu.pipeline_mode<synchronous>, transform_indices = @transform_4, window_bounds = array<i64: 1, 128>}, {transform_indices = @transform_5, window_bounds = array<i64: 2, 128>}]} {
    %c0 = arith.constant 0 : index
    %c0_0 = arith.constant 0 : index
    %0 = vector.load %arg2[%c0, %c0_0] : memref<2x32xf32, #tpu.memory_space<vmem>>, vector<2x32xf32>
    %1 = arith.truncf %0 : vector<2x32xf32> to vector<2x32xbf16>
    %c0_1 = arith.constant 0 : index
    %c0_2 = arith.constant 0 : index
    %2 = vector.load %arg3[%c0_1, %c0_2] : memref<32x128xbf16, #tpu.memory_space<vmem>>, vector<32x128xbf16>
    %cst = arith.constant dense<0.000000e+00> : vector<2x128xf32>
    %3 = tpu.matmul %1, %2, %cst {dimension_numbers = #tpu.dot_dimension_numbers<[1], [0], [0], [1], [0, 0, 1, 1], [], []>} : vector<2x32xbf16>, vector<32x128xbf16>, vector<2x128xf32> -> vector<2x128xf32>
    %c0_3 = arith.constant 0 : index
    %c0_4 = arith.constant 0 : index
    %4 = vector.load %arg4[%c0_3, %c0_4] : memref<1x128xbf16, #tpu.memory_space<vmem>>, vector<1x128xbf16>
    %5 = arith.extf %4 : vector<1x128xbf16> to vector<1x128xf32>
    %6 = vector.broadcast %5 : vector<1x128xf32> to vector<2x128xf32>
    %7 = arith.addf %3, %6 : vector<2x128xf32>
    %8 = arith.negf %7 : vector<2x128xf32>
    %9 = math.exp %8 : vector<2x128xf32>
    %cst_5 = arith.constant 1.000000e+00 : f32
    %10 = vector.broadcast %cst_5 : f32 to vector<2x128xf32>
    %11 = arith.addf %10, %9 : vector<2x128xf32>
    %12 = arith.divf %10, %11 : vector<2x128xf32>
    %13 = arith.mulf %7, %12 : vector<2x128xf32>
    %14 = arith.truncf %13 : vector<2x128xf32> to vector<2x128xbf16>
    %c0_6 = arith.constant 0 : index
    %c0_7 = arith.constant 0 : index
    %15 = vector.load %arg5[%c0_6, %c0_7] : memref<128x128xbf16, #tpu.memory_space<vmem>>, vector<128x128xbf16>
    %cst_8 = arith.constant dense<0.000000e+00> : vector<2x128xf32>
    %16 = tpu.matmul %14, %15, %cst_8 {dimension_numbers = #tpu.dot_dimension_numbers<[1], [0], [0], [1], [0, 0, 1, 1], [], []>} : vector<2x128xbf16>, vector<128x128xbf16>, vector<2x128xf32> -> vector<2x128xf32>
    %c0_9 = arith.constant 0 : index
    %c0_10 = arith.constant 0 : index
    %17 = vector.load %arg6[%c0_9, %c0_10] : memref<1x128xbf16, #tpu.memory_space<vmem>>, vector<1x128xbf16>
    %18 = arith.extf %17 : vector<1x128xbf16> to vector<1x128xf32>
    %19 = vector.broadcast %18 : vector<1x128xf32> to vector<2x128xf32>
    %20 = arith.addf %16, %19 : vector<2x128xf32>
    %c0_11 = arith.constant 0 : index
    %c0_12 = arith.constant 0 : index
    %21 = vector.load %arg7[%c0_11, %c0_12] : memref<2x128xf32, #tpu.memory_space<vmem>>, vector<2x128xf32>
    tpu.vector_store %arg7[%c0_11, %c0_12], %20 {strides = array<i32>} : memref<2x128xf32, #tpu.memory_space<vmem>>, vector<2x128xf32>,
    return
  }
  func.func @transform_0(%arg0: i32, %arg1: i32) -> (i32, i32) {
    %c0_i32 = arith.constant 0 : i32
    %c0_i32_0 = arith.constant 0 : i32
    return %arg0, %c0_i32 : i32, i32
  }
  func.func @transform_1(%arg0: i32, %arg1: i32) -> (i32, i32) {
    %c0_i32 = arith.constant 0 : i32
    %c0_i32_0 = arith.constant 0 : i32
    %c0_i32_1 = arith.constant 0 : i32
    return %c0_i32, %c0_i32_0 : i32, i32
  }
  func.func @transform_2(%arg0: i32, %arg1: i32) -> (i32, i32) {
    %c0_i32 = arith.constant 0 : i32
    %c0_i32_0 = arith.constant 0 : i32
    %c0_i32_1 = arith.constant 0 : i32
    return %c0_i32, %c0_i32_0 : i32, i32
  }
  func.func @transform_3(%arg0: i32, %arg1: i32) -> (i32, i32) {
    %c0_i32 = arith.constant 0 : i32
    %c0_i32_0 = arith.constant 0 : i32
    return %c0_i32, %arg1 : i32, i32
  }
  func.func @transform_4(%arg0: i32, %arg1: i32) -> (i32, i32) {
    %c0_i32 = arith.constant 0 : i32
    %c0_i32_0 = arith.constant 0 : i32
    return %c0_i32, %arg1 : i32, i32
  }
  func.func @transform_5(%arg0: i32, %arg1: i32) -> (i32, i32) {
    %c0_i32 = arith.constant 0 : i32
    return %arg0, %arg1 : i32, i32
  }
}

</mosaic_0001>

<llo_original>
// kernel: timestep_embedding_forward.1
$region0: #{timestep_embedding_forward.1}
  #allocation0 [shape = 'u32[]', space=smem, size = 0x4, offset = 0x4, fixed_abs, tag = 'smem constant byte address 0x4 - core index']
  #allocation1 [shape = 'u32[72,128]{1,0:T(1,128)}', space=vmem, size = 0x9000, scoped, tag = 'internal scratch']
  %s0 = inlined_call_operand.hbm [shape: f32[2,32], index: 0, kind: input, shape index: {}]
  %s1 = inlined_call_operand.hbm [shape: bf16[32,128], index: 1, kind: input, shape index: {}]
  %s2 = inlined_call_operand.hbm [shape: bf16[1,128], index: 2, kind: input, shape index: {}]
  %s3 = inlined_call_operand.hbm [shape: bf16[128,128], index: 3, kind: input, shape index: {}]
  %s4 = inlined_call_operand.vmem [shape: bf16[1,128], index: 4, kind: input, shape index: {}]
  %s5 = inlined_call_operand.hbm [shape: f32[2,128], index: 5, kind: output, shape index: {}]
  %s6 = sld [smem:[#allocation0]]
  $region46: #{timestep_embedding_forward.1} parent=0
    _
  %s8 = ssub.s32 1, %s6
  %s9 = scalar_select 0, %s8, %s6
  $region1: #{timestep_embedding_forward.1} parent=0
    #allocation2 [shape = 'u8[1024]{0}', space=vmem, size = 0x400, scoped, tag = 'input window, operand 0, single buffered']
    #allocation3 [shape = 's32[1]{0}', space=sflag, size = 0x4, scoped, tag = 'scoped memory for timestep_embedding_forward.1']
    #allocation4 [shape = 's32[1]{0}', space=sflag, size = 0x4, scoped, tag = 'scoped memory for timestep_embedding_forward.1']
    #allocation5 [shape = 'u8[8192]{0}', space=vmem, size = 0x2000, scoped, tag = 'input window, operand 1, single buffered']
    #allocation6 [shape = 's32[1]{0}', space=sflag, size = 0x4, scoped, tag = 'scoped memory for timestep_embedding_forward.1']
    #allocation7 [shape = 'u8[512]{0}', space=vmem, size = 0x400, scoped, tag = 'input window, operand 2, single buffered']
    #allocation8 [shape = 'u8[32768]{0}', space=vmem, size = 0x8000, scoped, tag = 'input window, operand 3, single buffered']
    #allocation9 [shape = 's32[1]{0}', space=sflag, size = 0x4, scoped, tag = 'scoped memory for timestep_embedding_forward.1']
    #allocation10 [shape = 'u8[1024]{0}', space=vmem, size = 0x400, scoped, tag = 'output window, operand 0, single buffered']
    %10 = vsyncpa [#allocation3], 0
    %11 = vsyncpa [#allocation6], 0
    %12 = vsyncpa [#allocation9], 0
    %13 = vsyncpa [#allocation4], 0
    // Predicated region
    $region2: #{timestep_embedding_forward.1} parent=1 // pred_check
      _
    $region3: #{timestep_embedding_forward.1} parent=1 // pred_check_branch
      %15 = sbr.rel (0) target = $region5
    $region4: #{timestep_embedding_forward.1} parent=1 // pred_region
      %17 = vsyncadd [#allocation3], 0
      %s19 = sshll.u32 %s0, 4
      %s20 = int_to_ptr.hbm [resolvable:$true] %s19
      %s21 = sshll.u32 [#allocation2], 4
      %s22 = int_to_ptr.vmem [resolvable:$true] %s21
      %24 = dma.hbm_to_vmem [thread:$0]  %s20, 32, %s22, [#allocation3]
    $region5: #{timestep_embedding_forward.1} parent=1 // pred_fallthru
      _
    // Predicated region
    $region6: #{timestep_embedding_forward.1} parent=1 // pred_check
      _
    $region7: #{timestep_embedding_forward.1} parent=1 // pred_check_branch
      %26 = sbr.rel (0) target = $region9
    $region8: #{timestep_embedding_forward.1} parent=1 // pred_region
      %28 = vsyncadd [#allocation6], 0
      %s29 = sshll.u32 %s1, 4
      %s30 = int_to_ptr.hbm [resolvable:$true] %s29
      %s31 = sshll.u32 [#allocation5], 4
      %s32 = int_to_ptr.vmem [resolvable:$true] %s31
      %37 = dma.hbm_to_vmem [thread:$0]  %s30, 256, %s32, [#allocation6], 64, 64, 4
    $region9: #{timestep_embedding_forward.1} parent=1 // pred_fallthru
      _
    // Predicated region
    $region10: #{timestep_embedding_forward.1} parent=1 // pred_check
      _
    $region11: #{timestep_embedding_forward.1} parent=1 // pred_check_branch
      %39 = sbr.rel (0) target = $region13
    $region12: #{timestep_embedding_forward.1} parent=1 // pred_region
      %41 = vsyncadd [#allocation6], 0
      %s43 = sshll.u32 %s2, 4
      %s44 = int_to_ptr.hbm [resolvable:$true] %s43
      %s45 = sshll.u32 [#allocation7], 4
      %s46 = int_to_ptr.vmem [resolvable:$true] %s45
      %48 = dma.hbm_to_vmem [thread:$0]  %s44, 16, %s46, [#allocation6]
    $region13: #{timestep_embedding_forward.1} parent=1 // pred_fallthru
      _
    // Predicated region
    $region14: #{timestep_embedding_forward.1} parent=1 // pred_check
      _
    $region15: #{timestep_embedding_forward.1} parent=1 // pred_check_branch
      %50 = sbr.rel (0) target = $region17
    $region16: #{timestep_embedding_forward.1} parent=1 // pred_region
      %52 = vsyncadd [#allocation9], 0
      %s53 = sshll.u32 %s3, 4
      %s54 = int_to_ptr.hbm [resolvable:$true] %s53
      %s55 = sshll.u32 [#allocation8], 4
      %s56 = int_to_ptr.vmem [resolvable:$true] %s55
      %61 = dma.hbm_to_vmem [thread:$0]  %s54, 1024, %s56, [#allocation9], 64, 64, 4
    $region17: #{timestep_embedding_forward.1} parent=1 // pred_fallthru
      _
    // Predicated region
    $region18: #{timestep_embedding_forward.1} parent=1 // pred_check
      _
    $region19: #{timestep_embedding_forward.1} parent=1 // pred_check_branch
      %63 = sbr.rel (0) target = $region21
    $region20: #{timestep_embedding_forward.1} parent=1 // pred_region
      _
    $region21: #{timestep_embedding_forward.1} parent=1 // pred_fallthru
      _
    // Predicated region
    $region22: #{timestep_embedding_forward.1} parent=1 // pred_check
      _
    $region23: #{timestep_embedding_forward.1} parent=1 // pred_check_branch
      %65 = sbr.rel (0) target = $region25
    $region24: #{timestep_embedding_forward.1} parent=1 // pred_region
      %67 = dma.done [#allocation3], 32
    $region25: #{timestep_embedding_forward.1} parent=1 // pred_fallthru
      _
    // Predicated region
    $region26: #{timestep_embedding_forward.1} parent=1 // pred_check
      _
    $region27: #{timestep_embedding_forward.1} parent=1 // pred_check_branch
      %69 = sbr.rel (0) target = $region29
    $region28: #{timestep_embedding_forward.1} parent=1 // pred_region
      %71 = dma.done [#allocation6], 256
    $region29: #{timestep_embedding_forward.1} parent=1 // pred_fallthru
      _
    // Predicated region
    $region30: #{timestep_embedding_forward.1} parent=1 // pred_check
      _
    $region31: #{timestep_embedding_forward.1} parent=1 // pred_check_branch
      %73 = sbr.rel (0) target = $region33
    $region32: #{timestep_embedding_forward.1} parent=1 // pred_region
      %75 = dma.done [#allocation6], 16
    $region33: #{timestep_embedding_forward.1} parent=1 // pred_fallthru
      _
    // Predicated region
    $region34: #{timestep_embedding_forward.1} parent=1 // pred_check
      _
    $region35: #{timestep_embedding_forward.1} parent=1 // pred_check_branch
      %77 = sbr.rel (0) target = $region37
    $region36: #{timestep_embedding_forward.1} parent=1 // pred_region
      %79 = dma.done [#allocation9], 1024
    $region37: #{timestep_embedding_forward.1} parent=1 // pred_fallthru
      _
    %v81 = vld [vmem:[#allocation2] sm:$0x3]
    %v82 = vpack.c.bf16 %v81, %v81
    %v83 = vld [vmem:[#allocation5] sm:$0xf]
    %v84 = vld [vmem:[#allocation5 + $0x4] sm:$0xf]
    %v85 = vld [vmem:[#allocation5 + $0x8] sm:$0xf]
    %v86 = vld [vmem:[#allocation5 + $0xc] sm:$0xf]
    %v87 = vld [vmem:[#allocation7] sm:$0x1]
    %v88 = vunpack.c.l.bf16 %v87
    %v89 = vperm.slane %v88, 0
    %v94 = vunpack.c.l.b16 %v83
    %v95 = vunpack.c.l.b16 %v84
    %v96 = vunpack.c.l.b16 %v85
    %v97 = vunpack.c.l.b16 %v86
    %v98 = vpack.c.b16 %v95, %v94
    %v99 = vpack.c.b16 %v97, %v96
    %vm102 = vcmask 261120
    %v104 = vsel %vm102, %v82, 0
    %106 = vmatpush.bf16.msra.mxu0 0
    %107 = vmatpush.bf16.msra.mxu0 0
    %108 = vmatpush.bf16.msra.mxu0 0
    %109 = vmatpush.bf16.msra.mxu0 0
    %110 = vmatpush.bf16.msra.mxu0 0
    %111 = vmatpush.bf16.msra.mxu0 0
    %112 = vmatpush.bf16.msra.mxu0 %v99
    %113 = vmatpush.bf16.msra.mxu0 %v98
    %114 = vmatmul.bf16.gmra.mxu0 %v104
    %v115 = vpop.f32.mrf.mxu0
    %v116 = vadd.f32 %v89, %v115
    %v117 = vpop.f32.mrf.mxu0
    %118 = vdwg.mxu0
    %v119 = vxor.u32 %v116, 2147483648
    %v120 = vmul.f32 %v119, 1.442695
    %v121 = vpow.pop %v120
    %v122 = vadd.f32 %v121, 1.0
    %v123 = vrcp.pop %v122
    %v124 = vmul.f32 %v122, %v123
    %v125 = vsub.f32 1.0, %v124
    %v126 = vmul.f32 %v123, %v125
    %v127 = vadd.f32 %v123, %v126
    %vm128 = vweird.f32 %v122
    %vm129 = vweird.f32 %v123
    %vm130 = vmor %vm128, %vm129
    %v131 = vsel %vm130, %v123, %v127
    %v132 = vand.u32 2147483647, %v122
    %vm133 = vcmp.eq.f32.partialorder %v132, 8.507059e+37
    %v134 = vand.u32 %v122, 2147483648
    %v135 = vor.u32 1.1754944e-38, %v134
    %v136 = vsel %vm133, %v135, %v131
    %v137 = vmul.f32 1.0, %v136
    %v138 = vmul.f32 %v116, %v137
    %v139 = vpack.c.bf16 %v138, %v138
    %v140 = vld [vmem:[#allocation8] sm:$0xf]
    %v141 = vld [vmem:[#allocation8 + $0x4] sm:$0xf]
    %v142 = vld [vmem:[#allocation8 + $0x8] sm:$0xf]
    %v143 = vld [vmem:[#allocation8 + $0xc] sm:$0xf]
    %v144 = vld [vmem:[#allocation8 + $0x10] sm:$0xf]
    %v145 = vld [vmem:[#allocation8 + $0x14] sm:$0xf]
    %v146 = vld [vmem:[#allocation8 + $0x18] sm:$0xf]
    %v147 = vld [vmem:[#allocation8 + $0x1c] sm:$0xf]
    %v148 = vld [vmem:[#allocation8 + $0x20] sm:$0xf]
    %v149 = vld [vmem:[#allocation8 + $0x24] sm:$0xf]
    %v150 = vld [vmem:[#allocation8 + $0x28] sm:$0xf]
    %v151 = vld [vmem:[#allocation8 + $0x2c] sm:$0xf]
    %v152 = vld [vmem:[#allocation8 + $0x30] sm:$0xf]
    %v153 = vld [vmem:[#allocation8 + $0x34] sm:$0xf]
    %v154 = vld [vmem:[#allocation8 + $0x38] sm:$0xf]
    %v155 = vld [vmem:[#allocation8 + $0x3c] sm:$0xf]
    %v156 = vld [vmem:[%s4] sm:$0x1]
    %v157 = vunpack.c.l.bf16 %v156
    %v158 = vperm.slane %v157, 0
    %v175 = vunpack.c.l.b16 %v140
    %v176 = vunpack.c.l.b16 %v141
    %v177 = vunpack.c.l.b16 %v142
    %v178 = vunpack.c.l.b16 %v143
    %v179 = vunpack.c.l.b16 %v144
    %v180 = vunpack.c.l.b16 %v145
    %v181 = vunpack.c.l.b16 %v146
    %v182 = vunpack.c.l.b16 %v147
    %v183 = vunpack.c.l.b16 %v148
    %v184 = vunpack.c.l.b16 %v149
    %v185 = vunpack.c.l.b16 %v150
    %v186 = vunpack.c.l.b16 %v151
    %v187 = vunpack.c.l.b16 %v152
    %v188 = vunpack.c.l.b16 %v153
    %v189 = vunpack.c.l.b16 %v154
    %v190 = vunpack.c.l.b16 %v155
    %v191 = vpack.c.b16 %v176, %v175
    %v192 = vpack.c.b16 %v178, %v177
    %v193 = vpack.c.b16 %v180, %v179
    %v194 = vpack.c.b16 %v182, %v181
    %v195 = vpack.c.b16 %v184, %v183
    %v196 = vpack.c.b16 %v186, %v185
    %v197 = vpack.c.b16 %v188, %v187
    %v198 = vpack.c.b16 %v190, %v189
    %207 = vmatpush.bf16.msra.mxu0 %v198
    %208 = vmatpush.bf16.msra.mxu0 %v197
    %209 = vmatpush.bf16.msra.mxu0 %v196
    %210 = vmatpush.bf16.msra.mxu0 %v195
    %211 = vmatpush.bf16.msra.mxu0 %v194
    %212 = vmatpush.bf16.msra.mxu0 %v193
    %213 = vmatpush.bf16.msra.mxu0 %v192
    %214 = vmatpush.bf16.msra.mxu0 %v191
    %215 = vmatmul.bf16.gmra.mxu0 %v139
    %v216 = vpop.f32.mrf.mxu0
    %v217 = vadd.f32 %v158, %v216
    %v218 = vpop.f32.mrf.mxu0
    %219 = vdwg.mxu0
    %220 = vst [vmem:[#allocation10] sm:$0x3] %v217
    // Predicated region
    $region38: #{timestep_embedding_forward.1} parent=1 // pred_check
      _
    $region39: #{timestep_embedding_forward.1} parent=1 // pred_check_branch
      %222 = sbr.rel (0) target = $region41
    $region40: #{timestep_embedding_forward.1} parent=1 // pred_region
      %224 = vsyncadd [#allocation4], 0
      %s226 = sshll.u32 [#allocation10], 4
      %s227 = int_to_ptr.vmem [resolvable:$true] %s226
      %s228 = sshll.u32 %s5, 4
      %s229 = int_to_ptr.hbm [resolvable:$true] %s228
      %231 = dma.vmem_to_hbm [thread:$0]  %s227, 32, %s229, [#allocation4]
    $region41: #{timestep_embedding_forward.1} parent=1 // pred_fallthru
      _
    // Predicated region
    $region42: #{timestep_embedding_forward.1} parent=1 // pred_check
      _
    $region43: #{timestep_embedding_forward.1} parent=1 // pred_check_branch
      %233 = sbr.rel (0) target = $region45
    $region44: #{timestep_embedding_forward.1} parent=1 // pred_region
      %235 = dma.done [#allocation4], 32
    $region45: #{timestep_embedding_forward.1} parent=1 // pred_fallthru
      _
    %236 = vsyncpa [#allocation3], 1
    %237 = vsyncpa [#allocation6], 1
    %238 = vsyncpa [#allocation9], 1
    %239 = vsyncpa [#allocation4], 1

</llo_original>
